<compile_context>
chip_gen: v7x
topology: tpu7x:2x2x1
jax: 0.10.0
libtpu: 0.0.40
codegen_flags: <defaults>
</compile_context>

<pallas_src>
import jax
import jax.numpy as jnp
from jax.experimental import pallas as pl
from jax.experimental.pallas import tpu as pltpu

N_IN = 784      # 28*28 flattened MNIST image
N_OUT = 100     # Linear(784, 100, bias=False)
N_PAD = 128     # lane-dense padded weight width (MXU / lane alignment)
TB_MAX = 4096   # batch tile cap: f32 input 2*4096*784*4 ~= 25.7 MB + out/weight
                # ~= 30 MB double-buffered -> fits v7x's 64 MiB VMEM with headroom


def _round_up(n, m):
    return ((n + m - 1) // m) * m


def _linear_logsoftmax_kernel(x_ref, wt_ref, o_ref):
    # x_ref:  (TB, 784)  f32  in VMEM (batch tile; last grid step may be ragged)
    # wt_ref: (784, 128) bf16 in VMEM (pre-transposed, zero-padded; grid-invariant)
    # o_ref:  (TB, 100)  f32  in VMEM (direct, unpadded output)
    x_bf16 = x_ref[...].astype(jnp.bfloat16)                       # in-kernel cast (VPU, free)
    y = jnp.dot(x_bf16, wt_ref[...],
                preferred_element_type=jnp.float32)                # (TB, 128) f32 on MXU

    # Exclude the zero-weight pad columns (>= 100) from the softmax reductions.
    col = jax.lax.broadcasted_iota(jnp.int32, y.shape, dimension=1)
    y = jnp.where(col < N_OUT, y, -jnp.inf)

    # Numerically-stable log_softmax over the last axis, in f32.
    m = jnp.max(y, axis=1, keepdims=True)
    s = y - m
    lse = jnp.log(jnp.sum(jnp.exp(s), axis=1, keepdims=True))
    o_ref[...] = (s - lse)[:, :N_OUT].astype(o_ref.dtype)          # masked lane store, 100 cols


def prepare_weight(weight):
    """One-time weight prep: (100, 784) PyTorch layout -> (784, 128) bf16, zero-padded."""
    wt = jnp.asarray(weight, jnp.float32).T.astype(jnp.bfloat16)    # (784, 100)
    return jnp.pad(wt, ((0, 0), (0, N_PAD - N_OUT)))                # (784, 128)


def net_forward(x, wt_prepared):
    """Forward pass of Net.

    Args:
      x:           float array, any shape whose trailing dims multiply to 784
                   (e.g. NCHW (B, 1, 28, 28)).  Passed to the kernel as f32.
      wt_prepared: (784, 128) bf16 array from prepare_weight() (done once).

    Returns:
      float32 array (B, 100) of log-probabilities.
    """
    x2d = x.reshape(-1, N_IN).astype(jnp.float32)    # reshape is metadata-only for contiguous x
    B = x2d.shape[0]

    # Batch tile: multiple of 16, capped for v7x VMEM; for mid-size batches shrink
    # so the grid has >= 2 "parallel" steps (both TensorCores on v7x get work).
    tb = min(TB_MAX, max(16, _round_up((B + 1) // 2, 16)))
    grid = (pl.cdiv(B, tb),)                         # ragged last block handled by Pallas

    out = pl.pallas_call(
        _linear_logsoftmax_kernel,
        out_shape=jax.ShapeDtypeStruct((B, N_OUT), jnp.float32),
        grid_spec=pltpu.PrefetchScalarGridSpec(
            num_scalar_prefetch=0,
            grid=grid,
            in_specs=[
                # batch tile marches over the grid (f32 read once, cast in-kernel)
                pl.BlockSpec((tb, N_IN), lambda i: (i, 0)),
                # weight: constant block index -> fetched once, stays VMEM-resident
                pl.BlockSpec((N_IN, N_PAD), lambda i: (0, 0)),
            ],
            # last dim == full array dim (100), so the non-(8,128) width is legal
            out_specs=pl.BlockSpec((tb, N_OUT), lambda i: (i, 0)),
        ),
        compiler_params=pltpu.CompilerParams(
            # batch rows are independent -> shard grid steps across TCs on v7x
            dimension_semantics=("parallel",),
            vmem_limit_bytes=48 * 1024 * 1024,
        ),
        cost_estimate=pl.CostEstimate(
            flops=2 * B * N_IN * N_PAD,
            transcendentals=B * N_PAD,
            bytes_accessed=B * N_IN * 4 + N_IN * N_PAD * 2 + B * N_OUT * 4,
        ),
    )(x2d, wt_prepared)

    return out


def _reference_forward(x, weight):
    x2d = x.reshape(-1, N_IN).astype(jnp.float32)
    y = x2d @ jnp.asarray(weight, jnp.float32).T
    return jax.nn.log_softmax(y, axis=1)


if __name__ == "__main__":
    key = jax.random.PRNGKey(0)
    kx, kw = jax.random.split(key)

    # MNIST-like NCHW input, small batch.
    x = jax.random.normal(kx, (2, 1, 28, 28), dtype=jnp.float32)

    # Deterministic init matching nn.Linear(784, 100, bias=False) default init:
    # uniform(-1/sqrt(784), 1/sqrt(784)), shape (100, 784).
    bound = 1.0 / jnp.sqrt(784.0)
    weight = jax.random.uniform(kw, (100, 784), dtype=jnp.float32,
                                minval=-bound, maxval=bound)

    wt_prepared = prepare_weight(weight)   # one-time prep (transpose + pad + bf16)

    out = net_forward(x, wt_prepared)
    out = jax.block_until_ready(out)

    ref = _reference_forward(x, weight)
    assert out.shape == (2, 100), out.shape
    # bf16 matmul inputs -> tolerance looser than pure-f32 path.
    assert jnp.allclose(out, ref, atol=3e-2, rtol=0.0), (
        "mismatch vs reference: max abs err = %f" % float(jnp.max(jnp.abs(out - ref))))

    print("KERNEL_OK")
</pallas_src>

<mosaic_0001>
module attributes {stable_mosaic.version = 11 : i64} {
  func.func @_linear_logsoftmax_kernel(%arg0: i32, %arg1: memref<16x784xf32, #tpu.memory_space<vmem>>, %arg2: memref<784x128xbf16, #tpu.memory_space<vmem>>, %arg3: memref<16x100xf32, #tpu.memory_space<vmem>>) attributes {dimension_semantics = [#tpu.dimension_semantics<parallel>], iteration_bounds = array<i64: 1>, scalar_prefetch = 0 : i64, scratch_operands = 0 : i64, tpu.core_type = #tpu.core_type<tc>, window_params = [{transform_indices = @transform_0, window_bounds = array<i64: 16, 784>}, {pipeline_mode = #tpu.pipeline_mode<synchronous>, transform_indices = @transform_1, window_bounds = array<i64: 784, 128>}, {transform_indices = @transform_2, window_bounds = array<i64: 16, 100>}]} {
    %c0 = arith.constant 0 : index
    %c0_0 = arith.constant 0 : index
    %0 = vector.load %arg1[%c0, %c0_0] : memref<16x784xf32, #tpu.memory_space<vmem>>, vector<16x784xf32>
    %1 = arith.truncf %0 : vector<16x784xf32> to vector<16x784xbf16>
    %c0_1 = arith.constant 0 : index
    %c0_2 = arith.constant 0 : index
    %2 = vector.load %arg2[%c0_1, %c0_2] : memref<784x128xbf16, #tpu.memory_space<vmem>>, vector<784x128xbf16>
    %cst = arith.constant dense<0.000000e+00> : vector<16x128xf32>
    %3 = tpu.matmul %1, %2, %cst {dimension_numbers = #tpu.dot_dimension_numbers<[1], [0], [0], [1], [0, 0, 1, 1], [], []>} : vector<16x784xbf16>, vector<784x128xbf16>, vector<16x128xf32> -> vector<16x128xf32>
    %4 = tpu.iota {dimensions = array<i32: 1>} : vector<16x128xi32>
    %c100_i32 = arith.constant 100 : i32
    %5 = vector.broadcast %c100_i32 : i32 to vector<16x128xi32>
    %6 = arith.cmpi slt, %4, %5 : vector<16x128xi32>
    %cst_3 = arith.constant 0xFF800000 : f32
    %7 = vector.broadcast %cst_3 : f32 to vector<16x128xf32>
    %8 = arith.select %6, %3, %7 : vector<16x128xi1>, vector<16x128xf32>
    %cst_4 = arith.constant dense<0xFF800000> : vector<16xf32>
    %9 = vector.multi_reduction <maximumf>, %8, %cst_4 [1] : vector<16x128xf32> to vector<16xf32>
    %10 = vector.shape_cast %9 : vector<16xf32> to vector<16x1xf32>
    %11 = vector.broadcast %10 : vector<16x1xf32> to vector<16x128xf32>
    %12 = arith.subf %8, %11 : vector<16x128xf32>
    %13 = math.exp %12 : vector<16x128xf32>
    %cst_5 = arith.constant dense<0.000000e+00> : vector<16xf32>
    %14 = vector.multi_reduction <add>, %13, %cst_5 [1] : vector<16x128xf32> to vector<16xf32>
    %15 = vector.shape_cast %14 : vector<16xf32> to vector<16x1xf32>
    %16 = math.log %15 : vector<16x1xf32>
    %17 = vector.broadcast %16 : vector<16x1xf32> to vector<16x128xf32>
    %18 = arith.subf %12, %17 : vector<16x128xf32>
    %19 = vector.extract_strided_slice %18 {offsets = [0, 0], sizes = [16, 100], strides = [1, 1]} : vector<16x128xf32> to vector<16x100xf32>
    %c0_6 = arith.constant 0 : index
    %c0_7 = arith.constant 0 : index
    %20 = vector.load %arg3[%c0_6, %c0_7] : memref<16x100xf32, #tpu.memory_space<vmem>>, vector<16x100xf32>
    tpu.vector_store %arg3[%c0_6, %c0_7], %19 {strides = array<i32>} : memref<16x100xf32, #tpu.memory_space<vmem>>, vector<16x100xf32>,
    return
  }
  func.func @transform_0(%arg0: i32) -> (i32, i32) {
    %c0_i32 = arith.constant 0 : i32
    %c0_i32_0 = arith.constant 0 : i32
    return %arg0, %c0_i32 : i32, i32
  }
  func.func @transform_1(%arg0: i32) -> (i32, i32) {
    %c0_i32 = arith.constant 0 : i32
    %c0_i32_0 = arith.constant 0 : i32
    %c0_i32_1 = arith.constant 0 : i32
    return %c0_i32, %c0_i32_0 : i32, i32
  }
  func.func @transform_2(%arg0: i32) -> (i32, i32) {
    %c0_i32 = arith.constant 0 : i32
    %c0_i32_0 = arith.constant 0 : i32
    return %arg0, %c0_i32 : i32, i32
  }
}

</mosaic_0001>

<llo_original>
// kernel: tpu_custom_call.1
$region0: #{tpu_custom_call.1}
  #allocation0 [shape = 'u32[]', space=smem, size = 0x4, offset = 0x4, fixed_abs, tag = 'smem constant byte address 0x4 - core index']
  #allocation1 [shape = 'u32[144,128]{1,0:T(1,128)}', space=vmem, size = 0x12000, scoped, tag = 'internal scratch']
  %s0 = inlined_call_operand.hbm [shape: f32[2,784], index: 0, kind: input, shape index: {}]
  %s1 = inlined_call_operand.hbm [shape: bf16[784,128], index: 1, kind: input, shape index: {}]
  %s2 = inlined_call_operand.hbm [shape: f32[2,100], index: 2, kind: output, shape index: {}]
  %s3 = sld [smem:[#allocation0]]
  $region26: #{tpu_custom_call.1} parent=0
    _
  %s5 = ssub.s32 1, %s3
  %s6 = scalar_select 0, %s5, %s3
  $region1: #{tpu_custom_call.1} parent=0
    #allocation2 [shape = 'u8[57344]{0}', space=vmem, size = 0xe000, scoped, tag = 'input window, operand 0, single buffered']
    #allocation3 [shape = 's32[1]{0}', space=sflag, size = 0x4, scoped, tag = 'scoped memory for tpu_custom_call.1']
    #allocation4 [shape = 's32[1]{0}', space=sflag, size = 0x4, scoped, tag = 'scoped memory for tpu_custom_call.1']
    #allocation5 [shape = 'u8[200704]{0}', space=vmem, size = 0x31000, scoped, tag = 'input window, operand 1, single buffered']
    #allocation6 [shape = 's32[1]{0}', space=sflag, size = 0x4, scoped, tag = 'scoped memory for tpu_custom_call.1']
    #allocation7 [shape = 'u8[8192]{0}', space=vmem, size = 0x2000, scoped, tag = 'output window, operand 0, single buffered']
    %7 = vsyncpa [#allocation3], 0
    %8 = vsyncpa [#allocation6], 0
    %9 = vsyncpa [#allocation4], 0
    // Predicated region
    $region2: #{tpu_custom_call.1} parent=1 // pred_check
      _
    $region3: #{tpu_custom_call.1} parent=1 // pred_check_branch
      %11 = sbr.rel (0) target = $region5
    $region4: #{tpu_custom_call.1} parent=1 // pred_region
      %s13 = ssub.s32 1792, 224
      %14 = vsyncadd [#allocation3], %s13
      %s15 = sshll.u32 [#allocation2], 4
      %s16 = int_to_ptr.vmem [resolvable:$true] %s15
      %21 = dma.hbm_to_vmem [thread:$0]  %s0, 224, %s16, [#allocation3], 224, 224, 14
    $region5: #{tpu_custom_call.1} parent=1 // pred_fallthru
      _
    // Predicated region
    $region6: #{tpu_custom_call.1} parent=1 // pred_check
      _
    $region7: #{tpu_custom_call.1} parent=1 // pred_check_branch
      %23 = sbr.rel (0) target = $region9
    $region8: #{tpu_custom_call.1} parent=1 // pred_region
      %s25 = ssub.s32 6272, 6272
      %26 = vsyncadd [#allocation6], %s25
      %s27 = sshll.u32 [#allocation5], 4
      %s28 = int_to_ptr.vmem [resolvable:$true] %s27
      %33 = dma.hbm_to_vmem [thread:$0]  %s1, 6272, %s28, [#allocation6], 64, 64, 4
    $region9: #{tpu_custom_call.1} parent=1 // pred_fallthru
      _
    // Predicated region
    $region10: #{tpu_custom_call.1} parent=1 // pred_check
      _
    $region11: #{tpu_custom_call.1} parent=1 // pred_check_branch
      %35 = sbr.rel (0) target = $region13
    $region12: #{tpu_custom_call.1} parent=1 // pred_region
      %36 = dma.done [#allocation3], 1792
    $region13: #{tpu_custom_call.1} parent=1 // pred_fallthru
      _
    // Predicated region
    $region14: #{tpu_custom_call.1} parent=1 // pred_check
      _
    $region15: #{tpu_custom_call.1} parent=1 // pred_check_branch
      %38 = sbr.rel (0) target = $region17
    $region16: #{tpu_custom_call.1} parent=1 // pred_region
      %39 = dma.done [#allocation6], 6272
    $region17: #{tpu_custom_call.1} parent=1 // pred_fallthru
      _
    %v41 = vld [vmem:[#allocation2] sm:$0xff]
    %v42 = vld [vmem:[#allocation2 + $0x8] sm:$0x3f]
    %v43 = vld [vmem:[#allocation2 + $0xe] sm:$0xff]
    %v44 = vld [vmem:[#allocation2 + $0x16] sm:$0x3f]
    %v45 = vld [vmem:[#allocation2 + $0x1c] sm:$0xff]
    %v46 = vld [vmem:[#allocation2 + $0x24] sm:$0x3f]
    %v47 = vld [vmem:[#allocation2 + $0x2a] sm:$0xff]
    %v48 = vld [vmem:[#allocation2 + $0x32] sm:$0x3f]
    %v49 = vld [vmem:[#allocation2 + $0x38] sm:$0xff]
    %v50 = vld [vmem:[#allocation2 + $0x40] sm:$0x3f]
    %v51 = vld [vmem:[#allocation2 + $0x46] sm:$0xff]
    %v52 = vld [vmem:[#allocation2 + $0x4e] sm:$0x3f]
    %v53 = vld [vmem:[#allocation2 + $0x54] sm:$0xff]
    %v54 = vld [vmem:[#allocation2 + $0x5c] sm:$0x3f]
    %v55 = vld [vmem:[#allocation2 + $0x62] sm:$0xff]
    %v56 = vld [vmem:[#allocation2 + $0x6a] sm:$0x3f]
    %v73 = vcombine.low %v41, %v43
    %v74 = vcombine.high %v41, %v43
    %v75 = vcombine.low %v45, %v47
    %v76 = vcombine.high %v45, %v47
    %v78 = vunpack.c.l.s4 1983009808
    %v79 = vunpack.c.0.s8 %v78
    %v80 = vlaneseq
    %v81 = vshrl.u32 %v80, 7
    %v82 = vsub.s32 %v79, %v81
    %v83 = vrot.slane %v73, %v82
    %v85 = vunpack.c.l.s4 1983009808
    %v86 = vunpack.c.0.s8 %v85
    %v87 = vlaneseq
    %v88 = vshrl.u32 %v87, 7
    %v89 = vsub.s32 %v86, %v88
    %v90 = vrot.slane %v74, %v89
    %v92 = vunpack.c.l.s4 1983009808
    %v93 = vunpack.c.0.s8 %v92
    %v94 = vlaneseq
    %v95 = vshrl.u32 %v94, 7
    %v96 = vsub.s32 %v93, %v95
    %v97 = vrot.slane %v75, %v96
    %v99 = vunpack.c.l.s4 1983009808
    %v100 = vunpack.c.0.s8 %v99
    %v101 = vlaneseq
    %v102 = vshrl.u32 %v101, 7
    %v103 = vsub.s32 %v100, %v102
    %v104 = vrot.slane %v76, %v103
    %v105 = vcombine.low %v83, %v97
    %v106 = vcombine.high %v83, %v97
    %v107 = vcombine.low %v90, %v104
    %v108 = vcombine.high %v90, %v104
    %v109 = vcombine.low %v42, %v44
    %v110 = vcombine.high %v42, %v44
    %v111 = vcombine.low %v46, %v48
    %v112 = vcombine.high %v46, %v48
    %v114 = vunpack.c.l.s4 1983009808
    %v115 = vunpack.c.0.s8 %v114
    %v116 = vlaneseq
    %v117 = vshrl.u32 %v116, 7
    %v118 = vsub.s32 %v115, %v117
    %v119 = vrot.slane %v109, %v118
    %v121 = vunpack.c.l.s4 1983009808
    %v122 = vunpack.c.0.s8 %v121
    %v123 = vlaneseq
    %v124 = vshrl.u32 %v123, 7
    %v125 = vsub.s32 %v122, %v124
    %v126 = vrot.slane %v110, %v125
    %v128 = vunpack.c.l.s4 1983009808
    %v129 = vunpack.c.0.s8 %v128
    %v130 = vlaneseq
    %v131 = vshrl.u32 %v130, 7
    %v132 = vsub.s32 %v129, %v131
    %v133 = vrot.slane %v111, %v132
    %v135 = vunpack.c.l.s4 1983009808
    %v136 = vunpack.c.0.s8 %v135
    %v137 = vlaneseq
    %v138 = vshrl.u32 %v137, 7
    %v139 = vsub.s32 %v136, %v138
    %v140 = vrot.slane %v112, %v139
    %v141 = vcombine.low %v119, %v133
    %v142 = vcombine.high %v119, %v133
    %v143 = vcombine.low %v126, %v140
    %v144 = vcombine.low %v49, %v51
    %v145 = vcombine.high %v49, %v51
    %v146 = vcombine.low %v53, %v55
    %v147 = vcombine.high %v53, %v55
    %v149 = vunpack.c.l.s4 1983009808
    %v150 = vunpack.c.0.s8 %v149
    %v151 = vlaneseq
    %v152 = vshrl.u32 %v151, 7
    %v153 = vsub.s32 %v150, %v152
    %v154 = vrot.slane %v144, %v153
    %v156 = vunpack.c.l.s4 1983009808
    %v157 = vunpack.c.0.s8 %v156
    %v158 = vlaneseq
    %v159 = vshrl.u32 %v158, 7
    %v160 = vsub.s32 %v157, %v159
    %v161 = vrot.slane %v145, %v160
    %v163 = vunpack.c.l.s4 1983009808
    %v164 = vunpack.c.0.s8 %v163
    %v165 = vlaneseq
    %v166 = vshrl.u32 %v165, 7
    %v167 = vsub.s32 %v164, %v166
    %v168 = vrot.slane %v146, %v167
    %v170 = vunpack.c.l.s4 1983009808
    %v171 = vunpack.c.0.s8 %v170
    %v172 = vlaneseq
    %v173 = vshrl.u32 %v172, 7
    %v174 = vsub.s32 %v171, %v173
    %v175 = vrot.slane %v147, %v174
    %v176 = vcombine.low %v154, %v168
    %v177 = vcombine.high %v154, %v168
    %v178 = vcombine.low %v161, %v175
    %v179 = vcombine.high %v161, %v175
    %v180 = vcombine.low %v50, %v52
    %v181 = vcombine.high %v50, %v52
    %v182 = vcombine.low %v54, %v56
    %v183 = vcombine.high %v54, %v56
    %v185 = vunpack.c.l.s4 1983009808
    %v186 = vunpack.c.0.s8 %v185
    %v187 = vlaneseq
    %v188 = vshrl.u32 %v187, 7
    %v189 = vsub.s32 %v186, %v188
    %v190 = vrot.slane %v180, %v189
    %v192 = vunpack.c.l.s4 1983009808
    %v193 = vunpack.c.0.s8 %v192
    %v194 = vlaneseq
    %v195 = vshrl.u32 %v194, 7
    %v196 = vsub.s32 %v193, %v195
    %v197 = vrot.slane %v181, %v196
    %v199 = vunpack.c.l.s4 1983009808
    %v200 = vunpack.c.0.s8 %v199
    %v201 = vlaneseq
    %v202 = vshrl.u32 %v201, 7
    %v203 = vsub.s32 %v200, %v202
    %v204 = vrot.slane %v182, %v203
    %v206 = vunpack.c.l.s4 1983009808
    %v207 = vunpack.c.0.s8 %v206
    %v208 = vlaneseq
    %v209 = vshrl.u32 %v208, 7
    %v210 = vsub.s32 %v207, %v209
    %v211 = vrot.slane %v183, %v210
    %v212 = vcombine.low %v190, %v204
    %v213 = vcombine.high %v190, %v204
    %v214 = vcombine.low %v197, %v211
    %v229 = vpack.c.bf16 %v176, %v105
    %v230 = vpack.c.bf16 %v177, %v106
    %v231 = vpack.c.bf16 %v178, %v107
    %v232 = vpack.c.bf16 %v179, %v108
    %v233 = vpack.c.bf16 %v212, %v141
    %v234 = vpack.c.bf16 %v213, %v142
    %v235 = vpack.c.bf16 %v214, %v143
    %v236 = vld [vmem:[#allocation5] sm:$0xf]
    %v237 = vld [vmem:[#allocation5 + $0x4] sm:$0xf]
    %v238 = vld [vmem:[#allocation5 + $0x8] sm:$0xf]
    %v239 = vld [vmem:[#allocation5 + $0xc] sm:$0xf]
    %v240 = vld [vmem:[#allocation5 + $0x10] sm:$0xf]
    %v241 = vld [vmem:[#allocation5 + $0x14] sm:$0xf]
    %v242 = vld [vmem:[#allocation5 + $0x18] sm:$0xf]
    %v243 = vld [vmem:[#allocation5 + $0x1c] sm:$0xf]
    %v244 = vld [vmem:[#allocation5 + $0x20] sm:$0xf]
    %v245 = vld [vmem:[#allocation5 + $0x24] sm:$0xf]
    %v246 = vld [vmem:[#allocation5 + $0x28] sm:$0xf]
    %v247 = vld [vmem:[#allocation5 + $0x2c] sm:$0xf]
    %v248 = vld [vmem:[#allocation5 + $0x30] sm:$0xf]
    %v249 = vld [vmem:[#allocation5 + $0x34] sm:$0xf]
    %v250 = vld [vmem:[#allocation5 + $0x38] sm:$0xf]
    %v251 = vld [vmem:[#allocation5 + $0x3c] sm:$0xf]
    %v252 = vld [vmem:[#allocation5 + $0x40] sm:$0xf]
    %v253 = vld [vmem:[#allocation5 + $0x44] sm:$0xf]
    %v254 = vld [vmem:[#allocation5 + $0x48] sm:$0xf]
    %v255 = vld [vmem:[#allocation5 + $0x4c] sm:$0xf]
    %v256 = vld [vmem:[#allocation5 + $0x50] sm:$0xf]
    %v257 = vld [vmem:[#allocation5 + $0x54] sm:$0xf]
    %v258 = vld [vmem:[#allocation5 + $0x58] sm:$0xf]
    %v259 = vld [vmem:[#allocation5 + $0x5c] sm:$0xf]
    %v260 = vld [vmem:[#allocation5 + $0x60] sm:$0xf]
    %v261 = vld [vmem:[#allocation5 + $0x64] sm:$0xf]
    %v262 = vld [vmem:[#allocation5 + $0x68] sm:$0xf]
    %v263 = vld [vmem:[#allocation5 + $0x6c] sm:$0xf]
    %v264 = vld [vmem:[#allocation5 + $0x70] sm:$0xf]
    %v265 = vld [vmem:[#allocation5 + $0x74] sm:$0xf]
    %v266 = vld [vmem:[#allocation5 + $0x78] sm:$0xf]
    %v267 = vld [vmem:[#allocation5 + $0x7c] sm:$0xf]
    %v268 = vld [vmem:[#allocation5 + $0x80] sm:$0xf]
    %v269 = vld [vmem:[#allocation5 + $0x84] sm:$0xf]
    %v270 = vld [vmem:[#allocation5 + $0x88] sm:$0xf]
    %v271 = vld [vmem:[#allocation5 + $0x8c] sm:$0xf]
    %v272 = vld [vmem:[#allocation5 + $0x90] sm:$0xf]
    %v273 = vld [vmem:[#allocation5 + $0x94] sm:$0xf]
    %v274 = vld [vmem:[#allocation5 + $0x98] sm:$0xf]
    %v275 = vld [vmem:[#allocation5 + $0x9c] sm:$0xf]
    %v276 = vld [vmem:[#allocation5 + $0xa0] sm:$0xf]
    %v277 = vld [vmem:[#allocation5 + $0xa4] sm:$0xf]
    %v278 = vld [vmem:[#allocation5 + $0xa8] sm:$0xf]
    %v279 = vld [vmem:[#allocation5 + $0xac] sm:$0xf]
    %v280 = vld [vmem:[#allocation5 + $0xb0] sm:$0xf]
    %v281 = vld [vmem:[#allocation5 + $0xb4] sm:$0xf]
    %v282 = vld [vmem:[#allocation5 + $0xb8] sm:$0xf]
    %v283 = vld [vmem:[#allocation5 + $0xbc] sm:$0xf]
    %v284 = vld [vmem:[#allocation5 + $0xc0] sm:$0xf]
    %v285 = vld [vmem:[#allocation5 + $0xc4] sm:$0xf]
    %v286 = vld [vmem:[#allocation5 + $0xc8] sm:$0xf]
    %v287 = vld [vmem:[#allocation5 + $0xcc] sm:$0xf]
    %v288 = vld [vmem:[#allocation5 + $0xd0] sm:$0xf]
    %v289 = vld [vmem:[#allocation5 + $0xd4] sm:$0xf]
    %v290 = vld [vmem:[#allocation5 + $0xd8] sm:$0xf]
    %v291 = vld [vmem:[#allocation5 + $0xdc] sm:$0xf]
    %v292 = vld [vmem:[#allocation5 + $0xe0] sm:$0xf]
    %v293 = vld [vmem:[#allocation5 + $0xe4] sm:$0xf]
    %v294 = vld [vmem:[#allocation5 + $0xe8] sm:$0xf]
    %v295 = vld [vmem:[#allocation5 + $0xec] sm:$0xf]
    %v296 = vld [vmem:[#allocation5 + $0xf0] sm:$0xf]
    %v297 = vld [vmem:[#allocation5 + $0xf4] sm:$0xf]
    %v298 = vld [vmem:[#allocation5 + $0xf8] sm:$0xf]
    %v299 = vld [vmem:[#allocation5 + $0xfc] sm:$0xf]
    %v300 = vld [vmem:[#allocation5 + $0x100] sm:$0xf]
    %v301 = vld [vmem:[#allocation5 + $0x104] sm:$0xf]
    %v302 = vld [vmem:[#allocation5 + $0x108] sm:$0xf]
    %v303 = vld [vmem:[#allocation5 + $0x10c] sm:$0xf]
    %v304 = vld [vmem:[#allocation5 + $0x110] sm:$0xf]
    %v305 = vld [vmem:[#allocation5 + $0x114] sm:$0xf]
    %v306 = vld [vmem:[#allocation5 + $0x118] sm:$0xf]
    %v307 = vld [vmem:[#allocation5 + $0x11c] sm:$0xf]
    %v308 = vld [vmem:[#allocation5 + $0x120] sm:$0xf]
    %v309 = vld [vmem:[#allocation5 + $0x124] sm:$0xf]
    %v310 = vld [vmem:[#allocation5 + $0x128] sm:$0xf]
    %v311 = vld [vmem:[#allocation5 + $0x12c] sm:$0xf]
    %v312 = vld [vmem:[#allocation5 + $0x130] sm:$0xf]
    %v313 = vld [vmem:[#allocation5 + $0x134] sm:$0xf]
    %v314 = vld [vmem:[#allocation5 + $0x138] sm:$0xf]
    %v315 = vld [vmem:[#allocation5 + $0x13c] sm:$0xf]
    %v316 = vld [vmem:[#allocation5 + $0x140] sm:$0xf]
    %v317 = vld [vmem:[#allocation5 + $0x144] sm:$0xf]
    %v318 = vld [vmem:[#allocation5 + $0x148] sm:$0xf]
    %v319 = vld [vmem:[#allocation5 + $0x14c] sm:$0xf]
    %v320 = vld [vmem:[#allocation5 + $0x150] sm:$0xf]
    %v321 = vld [vmem:[#allocation5 + $0x154] sm:$0xf]
    %v322 = vld [vmem:[#allocation5 + $0x158] sm:$0xf]
    %v323 = vld [vmem:[#allocation5 + $0x15c] sm:$0xf]
    %v324 = vld [vmem:[#allocation5 + $0x160] sm:$0xf]
    %v325 = vld [vmem:[#allocation5 + $0x164] sm:$0xf]
    %v326 = vld [vmem:[#allocation5 + $0x168] sm:$0xf]
    %v327 = vld [vmem:[#allocation5 + $0x16c] sm:$0xf]
    %v328 = vld [vmem:[#allocation5 + $0x170] sm:$0xf]
    %v329 = vld [vmem:[#allocation5 + $0x174] sm:$0xf]
    %v330 = vld [vmem:[#allocation5 + $0x178] sm:$0xf]
    %v331 = vld [vmem:[#allocation5 + $0x17c] sm:$0xf]
    %v332 = vld [vmem:[#allocation5 + $0x180] sm:$0xf]
    %v333 = vld [vmem:[#allocation5 + $0x184] sm:$0xf]
    %v432 = vunpack.c.l.b16 %v236
    %v433 = vunpack.c.l.b16 %v237
    %v434 = vunpack.c.l.b16 %v238
    %v435 = vunpack.c.l.b16 %v239
    %v436 = vunpack.c.l.b16 %v240
    %v437 = vunpack.c.l.b16 %v241
    %v438 = vunpack.c.l.b16 %v242
    %v439 = vunpack.c.l.b16 %v243
    %v440 = vunpack.c.l.b16 %v244
    %v441 = vunpack.c.l.b16 %v245
    %v442 = vunpack.c.l.b16 %v246
    %v443 = vunpack.c.l.b16 %v247
    %v444 = vunpack.c.l.b16 %v248
    %v445 = vunpack.c.l.b16 %v249
    %v446 = vunpack.c.l.b16 %v250
    %v447 = vunpack.c.l.b16 %v251
    %v448 = vunpack.c.l.b16 %v252
    %v449 = vunpack.c.l.b16 %v253
    %v450 = vunpack.c.l.b16 %v254
    %v451 = vunpack.c.l.b16 %v255
    %v452 = vunpack.c.l.b16 %v256
    %v453 = vunpack.c.l.b16 %v257
    %v454 = vunpack.c.l.b16 %v258
    %v455 = vunpack.c.l.b16 %v259
    %v456 = vunpack.c.l.b16 %v260
    %v457 = vunpack.c.l.b16 %v261
    %v458 = vunpack.c.l.b16 %v262
    %v459 = vunpack.c.l.b16 %v263
    %v460 = vunpack.c.l.b16 %v264
    %v461 = vunpack.c.l.b16 %v265
    %v462 = vunpack.c.l.b16 %v266
    %v463 = vunpack.c.l.b16 %v267
    %v464 = vunpack.c.l.b16 %v268
    %v465 = vunpack.c.l.b16 %v269
    %v466 = vunpack.c.l.b16 %v270
    %v467 = vunpack.c.l.b16 %v271
    %v468 = vunpack.c.l.b16 %v272
    %v469 = vunpack.c.l.b16 %v273
    %v470 = vunpack.c.l.b16 %v274
    %v471 = vunpack.c.l.b16 %v275
    %v472 = vunpack.c.l.b16 %v276
    %v473 = vunpack.c.l.b16 %v277
    %v474 = vunpack.c.l.b16 %v278
    %v475 = vunpack.c.l.b16 %v279
    %v476 = vunpack.c.l.b16 %v280
    %v477 = vunpack.c.l.b16 %v281
    %v478 = vunpack.c.l.b16 %v282
    %v479 = vunpack.c.l.b16 %v283
    %v480 = vunpack.c.l.b16 %v284
    %v481 = vunpack.c.l.b16 %v285
    %v482 = vunpack.c.l.b16 %v286
    %v483 = vunpack.c.l.b16 %v287
    %v484 = vunpack.c.l.b16 %v288
    %v485 = vunpack.c.l.b16 %v289
    %v486 = vunpack.c.l.b16 %v290
    %v487 = vunpack.c.l.b16 %v291
    %v488 = vunpack.c.l.b16 %v292
    %v489 = vunpack.c.l.b16 %v293
    %v490 = vunpack.c.l.b16 %v294
    %v491 = vunpack.c.l.b16 %v295
    %v492 = vunpack.c.l.b16 %v296
    %v493 = vunpack.c.l.b16 %v297
    %v494 = vunpack.c.l.b16 %v298
    %v495 = vunpack.c.l.b16 %v299
    %v496 = vunpack.c.l.b16 %v300
    %v497 = vunpack.c.l.b16 %v301
    %v498 = vunpack.c.l.b16 %v302
    %v499 = vunpack.c.l.b16 %v303
    %v500 = vunpack.c.l.b16 %v304
    %v501 = vunpack.c.l.b16 %v305
    %v502 = vunpack.c.l.b16 %v306
    %v503 = vunpack.c.l.b16 %v307
    %v504 = vunpack.c.l.b16 %v308
    %v505 = vunpack.c.l.b16 %v309
    %v506 = vunpack.c.l.b16 %v310
    %v507 = vunpack.c.l.b16 %v311
    %v508 = vunpack.c.l.b16 %v312
    %v509 = vunpack.c.l.b16 %v313
    %v510 = vunpack.c.l.b16 %v314
    %v511 = vunpack.c.l.b16 %v315
    %v512 = vunpack.c.l.b16 %v316
    %v513 = vunpack.c.l.b16 %v317
    %v514 = vunpack.c.l.b16 %v318
    %v515 = vunpack.c.l.b16 %v319
    %v516 = vunpack.c.l.b16 %v320
    %v517 = vunpack.c.l.b16 %v321
    %v518 = vunpack.c.l.b16 %v322
    %v519 = vunpack.c.l.b16 %v323
    %v520 = vunpack.c.l.b16 %v324
    %v521 = vunpack.c.l.b16 %v325
    %v522 = vunpack.c.l.b16 %v326
    %v523 = vunpack.c.l.b16 %v327
    %v524 = vunpack.c.l.b16 %v328
    %v525 = vunpack.c.l.b16 %v329
    %v526 = vunpack.c.l.b16 %v330
    %v527 = vunpack.c.l.b16 %v331
    %v528 = vunpack.c.l.b16 %v332
    %v529 = vunpack.c.l.b16 %v333
    %v530 = vpack.c.b16 %v433, %v432
    %v531 = vpack.c.b16 %v435, %v434
    %v532 = vpack.c.b16 %v437, %v436
    %v533 = vpack.c.b16 %v439, %v438
    %v534 = vpack.c.b16 %v441, %v440
    %v535 = vpack.c.b16 %v443, %v442
    %v536 = vpack.c.b16 %v445, %v444
    %v537 = vpack.c.b16 %v447, %v446
    %v538 = vpack.c.b16 %v449, %v448
    %v539 = vpack.c.b16 %v451, %v450
    %v540 = vpack.c.b16 %v453, %v452
    %v541 = vpack.c.b16 %v455, %v454
    %v542 = vpack.c.b16 %v457, %v456
    %v543 = vpack.c.b16 %v459, %v458
    %v544 = vpack.c.b16 %v461, %v460
    %v545 = vpack.c.b16 %v463, %v462
    %v546 = vpack.c.b16 %v465, %v464
    %v547 = vpack.c.b16 %v467, %v466
    %v548 = vpack.c.b16 %v469, %v468
    %v549 = vpack.c.b16 %v471, %v470
    %v550 = vpack.c.b16 %v473, %v472
    %v551 = vpack.c.b16 %v475, %v474
    %v552 = vpack.c.b16 %v477, %v476
    %v553 = vpack.c.b16 %v479, %v478
    %v554 = vpack.c.b16 %v481, %v480
    %v555 = vpack.c.b16 %v483, %v482
    %v556 = vpack.c.b16 %v485, %v484
    %v557 = vpack.c.b16 %v487, %v486
    %v558 = vpack.c.b16 %v489, %v488
    %v559 = vpack.c.b16 %v491, %v490
    %v560 = vpack.c.b16 %v493, %v492
    %v561 = vpack.c.b16 %v495, %v494
    %v562 = vpack.c.b16 %v497, %v496
    %v563 = vpack.c.b16 %v499, %v498
    %v564 = vpack.c.b16 %v501, %v500
    %v565 = vpack.c.b16 %v503, %v502
    %v566 = vpack.c.b16 %v505, %v504
    %v567 = vpack.c.b16 %v507, %v506
    %v568 = vpack.c.b16 %v509, %v508
    %v569 = vpack.c.b16 %v511, %v510
    %v570 = vpack.c.b16 %v513, %v512
    %v571 = vpack.c.b16 %v515, %v514
    %v572 = vpack.c.b16 %v517, %v516
    %v573 = vpack.c.b16 %v519, %v518
    %v574 = vpack.c.b16 %v521, %v520
    %v575 = vpack.c.b16 %v523, %v522
    %v576 = vpack.c.b16 %v525, %v524
    %v577 = vpack.c.b16 %v527, %v526
    %v578 = vpack.c.b16 %v529, %v528
    %vm628 = vcmask 130048
    %v630 = vsel %vm628, %v235, 0
    %632 = vmatprep.subr.bf16.mxu0 0
    %633 = vmatpush1.bf16.msra.mxu0 %v530
    %634 = vmatprep.subr.bf16.mxu0 0
    %635 = vmatpush1.bf16.msra.mxu0 %v531
    %636 = vmatprep.subr.bf16.mxu0 0
    %637 = vmatpush1.bf16.msra.mxu0 %v532
    %638 = vmatprep.subr.bf16.mxu0 0
    %639 = vmatpush1.bf16.msra.mxu0 %v533
    %640 = vmatprep.subr.bf16.mxu0 0
    %641 = vmatpush1.bf16.msra.mxu0 %v534
    %642 = vmatprep.subr.bf16.mxu0 0
    %643 = vmatpush1.bf16.msra.mxu0 %v535
    %644 = vmatprep.subr.bf16.mxu0 0
    %645 = vmatpush1.bf16.msra.mxu0 %v536
    %646 = vmatprep.subr.bf16.mxu0 0
    %647 = vmatpush1.bf16.msra.mxu0 %v537
    %648 = vmatprep.subr.bf16.mxu0 0
    %649 = vmatpush1.bf16.msra.mxu0 %v538
    %650 = vmatprep.subr.bf16.mxu0 0
    %651 = vmatpush1.bf16.msra.mxu0 %v539
    %652 = vmatprep.subr.bf16.mxu0 0
    %653 = vmatpush1.bf16.msra.mxu0 %v540
    %654 = vmatprep.subr.bf16.mxu0 0
    %655 = vmatpush1.bf16.msra.mxu0 %v541
    %656 = vmatprep.subr.bf16.mxu0 0
    %657 = vmatpush1.bf16.msra.mxu0 %v542
    %658 = vmatprep.subr.bf16.mxu0 0
    %659 = vmatpush1.bf16.msra.mxu0 %v543
    %660 = vmatprep.subr.bf16.mxu0 0
    %661 = vmatpush1.bf16.msra.mxu0 %v544
    %662 = vmatprep.subr.bf16.mxu0 0
    %663 = vmatpush1.bf16.msra.mxu0 %v545
    %664 = vmatprep.mubr.bf16.mxu0 %v230
    %665 = vmatmul.mubr.bf16.gmra.mrb[0].mxu0 %v229
    %v666 = vpop.f32.mrb[0].mxu0
    %v667 = vadd.f32 0.0, %v666
    %v668 = vpop.f32.mrb[0].mxu0
    %v669 = vpop.f32.mrb[0].mxu0
    %v670 = vadd.f32 0.0, %v669
    %v671 = vpop.f32.mrb[0].mxu0
    %672 = vdwg.mxu0
    %673 = vmatprep.subr.bf16.mxu0 0
    %674 = vmatpush1.bf16.msra.mxu0 %v546
    %675 = vmatprep.subr.bf16.mxu0 0
    %676 = vmatpush1.bf16.msra.mxu0 %v547
    %677 = vmatprep.subr.bf16.mxu0 0
    %678 = vmatpush1.bf16.msra.mxu0 %v548
    %679 = vmatprep.subr.bf16.mxu0 0
    %680 = vmatpush1.bf16.msra.mxu0 %v549
    %681 = vmatprep.subr.bf16.mxu0 0
    %682 = vmatpush1.bf16.msra.mxu0 %v550
    %683 = vmatprep.subr.bf16.mxu0 0
    %684 = vmatpush1.bf16.msra.mxu0 %v551
    %685 = vmatprep.subr.bf16.mxu0 0
    %686 = vmatpush1.bf16.msra.mxu0 %v552
    %687 = vmatprep.subr.bf16.mxu0 0
    %688 = vmatpush1.bf16.msra.mxu0 %v553
    %689 = vmatprep.subr.bf16.mxu0 0
    %690 = vmatpush1.bf16.msra.mxu0 %v554
    %691 = vmatprep.subr.bf16.mxu0 0
    %692 = vmatpush1.bf16.msra.mxu0 %v555
    %693 = vmatprep.subr.bf16.mxu0 0
    %694 = vmatpush1.bf16.msra.mxu0 %v556
    %695 = vmatprep.subr.bf16.mxu0 0
    %696 = vmatpush1.bf16.msra.mxu0 %v557
    %697 = vmatprep.subr.bf16.mxu0 0
    %698 = vmatpush1.bf16.msra.mxu0 %v558
    %699 = vmatprep.subr.bf16.mxu0 0
    %700 = vmatpush1.bf16.msra.mxu0 %v559
    %701 = vmatprep.subr.bf16.mxu0 0
    %702 = vmatpush1.bf16.msra.mxu0 %v560
    %703 = vmatprep.subr.bf16.mxu0 0
    %704 = vmatpush1.bf16.msra.mxu0 %v561
    %705 = vmatprep.mubr.bf16.mxu0 %v232
    %706 = vmatmul.mubr.bf16.gmra.mrb[0].mxu0 %v231
    %v707 = vpop.f32.mrb[0].mxu0
    %v708 = vadd.f32 %v667, %v707
    %v709 = vpop.f32.mrb[0].mxu0
    %v710 = vpop.f32.mrb[0].mxu0
    %v711 = vadd.f32 %v670, %v710
    %v712 = vpop.f32.mrb[0].mxu0
    %713 = vdwg.mxu0
    %714 = vmatprep.subr.bf16.mxu0 0
    %715 = vmatpush1.bf16.msra.mxu0 %v562
    %716 = vmatprep.subr.bf16.mxu0 0
    %717 = vmatpush1.bf16.msra.mxu0 %v563
    %718 = vmatprep.subr.bf16.mxu0 0
    %719 = vmatpush1.bf16.msra.mxu0 %v564
    %720 = vmatprep.subr.bf16.mxu0 0
    %721 = vmatpush1.bf16.msra.mxu0 %v565
    %722 = vmatprep.subr.bf16.mxu0 0
    %723 = vmatpush1.bf16.msra.mxu0 %v566
    %724 = vmatprep.subr.bf16.mxu0 0
    %725 = vmatpush1.bf16.msra.mxu0 %v567
    %726 = vmatprep.subr.bf16.mxu0 0
    %727 = vmatpush1.bf16.msra.mxu0 %v568
    %728 = vmatprep.subr.bf16.mxu0 0
    %729 = vmatpush1.bf16.msra.mxu0 %v569
    %730 = vmatprep.subr.bf16.mxu0 0
    %731 = vmatpush1.bf16.msra.mxu0 %v570
    %732 = vmatprep.subr.bf16.mxu0 0
    %733 = vmatpush1.bf16.msra.mxu0 %v571
    %734 = vmatprep.subr.bf16.mxu0 0
    %735 = vmatpush1.bf16.msra.mxu0 %v572
    %736 = vmatprep.subr.bf16.mxu0 0
    %737 = vmatpush1.bf16.msra.mxu0 %v573
    %738 = vmatprep.subr.bf16.mxu0 0
    %739 = vmatpush1.bf16.msra.mxu0 %v574
    %740 = vmatprep.subr.bf16.mxu0 0
    %741 = vmatpush1.bf16.msra.mxu0 %v575
    %742 = vmatprep.subr.bf16.mxu0 0
    %743 = vmatpush1.bf16.msra.mxu0 %v576
    %744 = vmatprep.subr.bf16.mxu0 0
    %745 = vmatpush1.bf16.msra.mxu0 %v577
    %746 = vmatprep.mubr.bf16.mxu0 %v234
    %747 = vmatmul.mubr.bf16.gmra.mrb[0].mxu0 %v233
    %v748 = vpop.f32.mrb[0].mxu0
    %v749 = vadd.f32 %v708, %v748
    %v750 = vpop.f32.mrb[0].mxu0
    %v751 = vpop.f32.mrb[0].mxu0
    %v752 = vadd.f32 %v711, %v751
    %v753 = vpop.f32.mrb[0].mxu0
    %754 = vdwg.mxu0
    %755 = vmatprep.subr.bf16.mxu0 0
    %756 = vmatpush1.bf16.msra.mxu0 %v578
    %757 = vmatprep.subr.bf16.mxu0 0
    %758 = vmatpush1.bf16.msra.mxu0 0
    %759 = vmatprep.subr.bf16.mxu0 0
    %760 = vmatpush1.bf16.msra.mxu0 0
    %761 = vmatprep.subr.bf16.mxu0 0
    %762 = vmatpush1.bf16.msra.mxu0 0
    %763 = vmatprep.subr.bf16.mxu0 0
    %764 = vmatpush1.bf16.msra.mxu0 0
    %765 = vmatprep.subr.bf16.mxu0 0
    %766 = vmatpush1.bf16.msra.mxu0 0
    %767 = vmatprep.subr.bf16.mxu0 0
    %768 = vmatpush1.bf16.msra.mxu0 0
    %769 = vmatprep.subr.bf16.mxu0 0
    %770 = vmatpush1.bf16.msra.mxu0 0
    %771 = vmatprep.subr.bf16.mxu0 0
    %772 = vmatpush1.bf16.msra.mxu0 0
    %773 = vmatprep.subr.bf16.mxu0 0
    %774 = vmatpush1.bf16.msra.mxu0 0
    %775 = vmatprep.subr.bf16.mxu0 0
    %776 = vmatpush1.bf16.msra.mxu0 0
    %777 = vmatprep.subr.bf16.mxu0 0
    %778 = vmatpush1.bf16.msra.mxu0 0
    %779 = vmatprep.subr.bf16.mxu0 0
    %780 = vmatpush1.bf16.msra.mxu0 0
    %781 = vmatprep.subr.bf16.mxu0 0
    %782 = vmatpush1.bf16.msra.mxu0 0
    %783 = vmatprep.subr.bf16.mxu0 0
    %784 = vmatpush1.bf16.msra.mxu0 0
    %785 = vmatprep.subr.bf16.mxu0 0
    %786 = vmatpush1.bf16.msra.mxu0 0
    %787 = vmatprep.mubr.bf16.mxu0 0
    %788 = vmatmul.mubr.bf16.gmra.mrb[0].mxu0 %v630
    %v789 = vpop.f32.mrb[0].mxu0
    %v790 = vadd.f32 %v749, %v789
    %v791 = vpop.f32.mrb[0].mxu0
    %v792 = vpop.f32.mrb[0].mxu0
    %v793 = vadd.f32 %v752, %v792
    %v794 = vpop.f32.mrb[0].mxu0
    %795 = vdwg.mxu0
    %v796 = vlaneseq
    %v797 = vand.u32 %v796, 127
    %vm798 = vcmp.lt.s32.totalorder %v797, 100
    %v799 = vsel %vm798, %v790, -inf
    %v800 = vsel %vm798, %v793, -inf
    %801 = vmax.xlane.f32.xlu0 %v799
    %v802 = vpop.xlane.xlu0 %801
    %803 = vmax.xlane.f32.xlu0 %v800
    %v804 = vpop.xlane.xlu0 %803
    %v805 = vsub.f32 %v799, %v802
    %v806 = vsub.f32 %v800, %v804
    %v807 = vmul.f32 %v805, 1.442695
    %v808 = vpow.pop %v807
    %v809 = vmul.f32 %v806, 1.442695
    %v810 = vpow.pop %v809
    %811 = vadd.xlane.f32.xlu0 %v808
    %v812 = vpop.xlane.xlu0 %811
    %813 = vadd.xlane.f32.xlu0 %v810
    %v814 = vpop.xlane.xlu0 %813
    %v815 = vlog2.pop %v812
    %v816 = vmul.f32 %v815, 0.6931472
    %v817 = vlog2.pop %v814
    %v818 = vmul.f32 %v817, 0.6931472
    %v819 = vsub.f32 %v805, %v816
    %v820 = vsub.f32 %v806, %v818
    %vm821 = vcmask 818176
    %822 = vst.msk [vmem:[#allocation7] sm:$0xff] %vm821, %v819
    %823 = vst.msk [vmem:[#allocation7 + $0x8] sm:$0xff] %vm821, %v820
    // Predicated region
    $region18: #{tpu_custom_call.1} parent=1 // pred_check
      _
    $region19: #{tpu_custom_call.1} parent=1 // pred_check_branch
      %825 = sbr.rel (0) target = $region21
    $region20: #{tpu_custom_call.1} parent=1 // pred_region
      %s827 = ssub.s32 256, 32
      %828 = vsyncadd [#allocation4], %s827
      %s829 = sshll.u32 [#allocation7], 4
      %s830 = int_to_ptr.vmem [resolvable:$true] %s829
      %835 = dma.vmem_to_hbm [thread:$0]  %s830, 32, %s2, [#allocation4], 32, 32, 2
    $region21: #{tpu_custom_call.1} parent=1 // pred_fallthru
      _
    // Predicated region
    $region22: #{tpu_custom_call.1} parent=1 // pred_check
      _
    $region23: #{tpu_custom_call.1} parent=1 // pred_check_branch
      %837 = sbr.rel (0) target = $region25
    $region24: #{tpu_custom_call.1} parent=1 // pred_region
      %838 = dma.done [#allocation4], 256
    $region25: #{tpu_custom_call.1} parent=1 // pred_fallthru
      _
    %839 = vsyncpa [#allocation3], 1
    %840 = vsyncpa [#allocation6], 1
    %841 = vsyncpa [#allocation4], 1

</llo_original>
